<compile_context>
chip_gen: v5e
topology: v5e:2x2
jax: 0.10.0
libtpu: 0.0.40
codegen_flags: <defaults>
</compile_context>

<pallas_src>
import functools

import jax
import jax.numpy as jnp
from jax.experimental import pallas as pl
from jax.experimental.pallas import tpu as pltpu


def _make_ls_ce_kernel(smoothing: float, n_rows: int, tm: int, c: int):
    confidence = 1.0 - smoothing
    inv_c = 1.0 / float(c)
    inv_n = 1.0 / float(n_rows)

    def kernel(x_ref, tgt_ref, out_ref):
        i = pl.program_id(0)

        # Zero the resident accumulator on the first tile.
        @pl.when(i == 0)
        def _():
            out_ref[...] = jnp.zeros_like(out_ref)

        x = x_ref[...].astype(jnp.float32)            # (TM, C) f32 compute
        tgt = tgt_ref[...]                            # (TM, 1) int32

        # Fused log-softmax statistics (no logprobs materialization).
        m = jnp.max(x, axis=-1, keepdims=True)        # (TM, 1)
        z = x - m                                     # (TM, C)
        lse = jnp.log(jnp.sum(jnp.exp(z), axis=-1, keepdims=True))  # (TM, 1)

        # z at the target class via one-hot select (TPU-friendly gather).
        col = jax.lax.broadcasted_iota(jnp.int32, z.shape, 1)        # (TM, C)
        z_tgt = jnp.sum(jnp.where(col == tgt, z, 0.0),
                        axis=-1, keepdims=True)                      # (TM, 1)
        sum_z = jnp.sum(z, axis=-1, keepdims=True)                   # (TM, 1)

        nll = lse - z_tgt                              # -logprobs[target]
        smooth = lse - sum_z * inv_c                   # -mean(logprobs)
        loss = confidence * nll + smoothing * smooth   # (TM, 1)

        # Mask rows of the last (possibly padded) tile.
        row = i * tm + jax.lax.broadcasted_iota(jnp.int32, loss.shape, 0)
        loss = jnp.where(row < n_rows, loss, 0.0)

        # Accumulate the partial sum into the resident (1,1) output block.
        out_ref[...] += jnp.sum(loss, axis=0, keepdims=True)

        # Finalize: mean over the true batch size.
        @pl.when(i == pl.num_programs(0) - 1)
        def _():
            out_ref[...] = out_ref[...] * inv_n

    return kernel


def label_smoothing_cross_entropy(x: jax.Array,
                                  target: jax.Array,
                                  smoothing: float = 0.1,
                                  block_rows: int | None = None) -> jax.Array:
    """x: (N, C) logits (f32 or bf16), target: (N,) int. Returns scalar mean loss."""
    assert smoothing < 1.0
    n, c = x.shape
    itemsize = jnp.dtype(x.dtype).itemsize

    if block_rows is None:
        # ~16 MiB for the double-buffered logits tile; multiple of 8 rows;
        # capped at 1024 rows and at the (8-padded) batch size.
        budget = 16 * 1024 * 1024
        tm = budget // (2 * c * itemsize)
        tm = max(8, min(1024, (tm // 8) * 8))
        tm = min(tm, max(8, pl.cdiv(n, 8) * 8))
    else:
        tm = block_rows
    num_tiles = pl.cdiv(n, tm)

    tgt2d = target.astype(jnp.int32).reshape(n, 1)

    # Explicit scoped-VMEM budget: 2x double-buffered logits tile,
    # double-buffered (TM,1)->(TM,128)-padded target tile, plus slack.
    vmem_limit = int(min(48 * 1024 * 1024,
                         2 * tm * c * itemsize + 2 * tm * 128 * 4 + (4 << 20)))

    out = pl.pallas_call(
        _make_ls_ce_kernel(smoothing, n, tm, c),
        out_shape=jax.ShapeDtypeStruct((1, 1), jnp.float32),
        grid=(num_tiles,),
        in_specs=[
            pl.BlockSpec((tm, c), lambda i: (i, 0)),   # logits, native dtype
            pl.BlockSpec((tm, 1), lambda i: (i, 0)),   # targets
        ],
        out_specs=pl.BlockSpec((1, 1), lambda i: (0, 0)),  # resident accumulator
        compiler_params=pltpu.CompilerParams(
            dimension_semantics=("arbitrary",),
            vmem_limit_bytes=vmem_limit,
        ),
    )(x, tgt2d)
    return out[0, 0]


def _reference(x, target, smoothing=0.1):
    confidence = 1.0 - smoothing
    logprobs = jax.nn.log_softmax(x.astype(jnp.float32), axis=-1)
    nll = -jnp.take_along_axis(logprobs, target[:, None], axis=-1)[:, 0]
    smooth = -jnp.mean(logprobs, axis=-1)
    return jnp.mean(confidence * nll + smoothing * smooth)


if __name__ == "__main__":
    key = jax.random.PRNGKey(0)
    kx, kt = jax.random.split(key)

    N, C = 16, 32                     # small batch of logits over 32 classes
    x = jax.random.normal(kx, (N, C), dtype=jnp.float32)
    target = jax.random.randint(kt, (N,), 0, C, dtype=jnp.int32)

    # f32 path, forced to 2 row-tiles to exercise the grid / accumulator.
    loss = label_smoothing_cross_entropy(x, target, smoothing=0.1, block_rows=8)
    loss = jax.block_until_ready(loss)
    ref = _reference(x, target, smoothing=0.1)
    assert jnp.allclose(loss, ref, atol=1e-5, rtol=1e-5), (loss, ref)

    # bf16 native-dtype DMA path (f32 accumulation happens in-kernel).
    x_bf16 = x.astype(jnp.bfloat16)
    loss_bf = label_smoothing_cross_entropy(x_bf16, target, smoothing=0.1,
                                            block_rows=8)
    loss_bf = jax.block_until_ready(loss_bf)
    ref_bf = _reference(x_bf16, target, smoothing=0.1)
    assert jnp.allclose(loss_bf, ref_bf, atol=1e-3, rtol=1e-3), (loss_bf, ref_bf)

    print("KERNEL_OK")
</pallas_src>

<mosaic_0001>
module attributes {stable_mosaic.version = 11 : i64} {
  func.func @kernel(%arg0: i32, %arg1: memref<8x32xf32, #tpu.memory_space<vmem>>, %arg2: memref<8x1xi32, #tpu.memory_space<vmem>>, %arg3: memref<1x1xf32, #tpu.memory_space<vmem>>) attributes {dimension_semantics = [#tpu.dimension_semantics<arbitrary>], iteration_bounds = array<i64: 2>, scalar_prefetch = 0 : i64, scratch_operands = 0 : i64, tpu.core_type = #tpu.core_type<tc>, window_params = [{transform_indices = @transform_0, window_bounds = array<i64: 8, 32>}, {transform_indices = @transform_1, window_bounds = array<i64: 8, 1>}, {pipeline_mode = #tpu.pipeline_mode<synchronous>, transform_indices = @transform_2, window_bounds = array<i64: 1, 1>}]} {
    %c0_i32 = arith.constant 0 : i32
    %0 = arith.cmpi eq, %arg0, %c0_i32 : i32
    %1 = arith.extui %0 : i1 to i32
    %c0_i32_0 = arith.constant 0 : i32
    %2 = arith.cmpi ne, %1, %c0_i32_0 : i32
    scf.if %2 {
      %cst_18 = arith.constant 0.000000e+00 : f32
      %47 = vector.broadcast %cst_18 : f32 to vector<1x1xf32>
      %c0_19 = arith.constant 0 : index
      %c0_20 = arith.constant 0 : index
      %48 = vector.load %arg3[%c0_19, %c0_20] : memref<1x1xf32, #tpu.memory_space<vmem>>, vector<1x1xf32>
      tpu.vector_store %arg3[%c0_19, %c0_20], %47 {strides = array<i32>} : memref<1x1xf32, #tpu.memory_space<vmem>>, vector<1x1xf32>,
    } else {
    }
    %c0 = arith.constant 0 : index
    %c0_1 = arith.constant 0 : index
    %3 = vector.load %arg1[%c0, %c0_1] : memref<8x32xf32, #tpu.memory_space<vmem>>, vector<8x32xf32>
    %c0_2 = arith.constant 0 : index
    %c0_3 = arith.constant 0 : index
    %4 = vector.load %arg2[%c0_2, %c0_3] : memref<8x1xi32, #tpu.memory_space<vmem>>, vector<8x1xi32>
    %cst = arith.constant dense<0xFF800000> : vector<8xf32>
    %5 = vector.multi_reduction <maximumf>, %3, %cst [1] : vector<8x32xf32> to vector<8xf32>
    %6 = vector.shape_cast %5 : vector<8xf32> to vector<8x1xf32>
    %7 = vector.broadcast %6 : vector<8x1xf32> to vector<8x32xf32>
    %8 = arith.subf %3, %7 : vector<8x32xf32>
    %9 = math.exp %8 : vector<8x32xf32>
    %cst_4 = arith.constant dense<0.000000e+00> : vector<8xf32>
    %10 = vector.multi_reduction <add>, %9, %cst_4 [1] : vector<8x32xf32> to vector<8xf32>
    %11 = vector.shape_cast %10 : vector<8xf32> to vector<8x1xf32>
    %12 = math.log %11 : vector<8x1xf32>
    %13 = tpu.iota {dimensions = array<i32: 1>} : vector<8x32xi32>
    %14 = vector.broadcast %4 : vector<8x1xi32> to vector<8x32xi32>
    %15 = arith.cmpi eq, %13, %14 : vector<8x32xi32>
    %cst_5 = arith.constant 0.000000e+00 : f32
    %16 = vector.broadcast %cst_5 : f32 to vector<8x32xf32>
    %17 = arith.select %15, %8, %16 : vector<8x32xi1>, vector<8x32xf32>
    %cst_6 = arith.constant dense<0.000000e+00> : vector<8xf32>
    %18 = vector.multi_reduction <add>, %17, %cst_6 [1] : vector<8x32xf32> to vector<8xf32>
    %19 = vector.shape_cast %18 : vector<8xf32> to vector<8x1xf32>
    %cst_7 = arith.constant dense<0.000000e+00> : vector<8xf32>
    %20 = vector.multi_reduction <add>, %8, %cst_7 [1] : vector<8x32xf32> to vector<8xf32>
    %21 = vector.shape_cast %20 : vector<8xf32> to vector<8x1xf32>
    %22 = arith.subf %12, %19 : vector<8x1xf32>
    %cst_8 = arith.constant 3.125000e-02 : f32
    %23 = vector.broadcast %cst_8 : f32 to vector<8x1xf32>
    %24 = arith.mulf %21, %23 : vector<8x1xf32>
    %25 = arith.subf %12, %24 : vector<8x1xf32>
    %cst_9 = arith.constant 0.899999976 : f32
    %26 = vector.broadcast %cst_9 : f32 to vector<8x1xf32>
    %27 = arith.mulf %26, %22 : vector<8x1xf32>
    %cst_10 = arith.constant 1.000000e-01 : f32
    %28 = vector.broadcast %cst_10 : f32 to vector<8x1xf32>
    %29 = arith.mulf %28, %25 : vector<8x1xf32>
    %30 = arith.addf %27, %29 : vector<8x1xf32>
    %c8_i32 = arith.constant 8 : i32
    %31 = arith.muli %arg0, %c8_i32 : i32
    %32 = tpu.iota {dimensions = array<i32: 0>} : vector<8x1xi32>
    %33 = vector.broadcast %31 : i32 to vector<8x1xi32>
    %34 = arith.addi %33, %32 : vector<8x1xi32>
    %c16_i32 = arith.constant 16 : i32
    %35 = vector.broadcast %c16_i32 : i32 to vector<8x1xi32>
    %36 = arith.cmpi slt, %34, %35 : vector<8x1xi32>
    %cst_11 = arith.constant 0.000000e+00 : f32
    %37 = vector.broadcast %cst_11 : f32 to vector<8x1xf32>
    %38 = arith.select %36, %30, %37 : vector<8x1xi1>, vector<8x1xf32>
    %c0_12 = arith.constant 0 : index
    %c0_13 = arith.constant 0 : index
    %39 = vector.load %arg3[%c0_12, %c0_13] : memref<1x1xf32, #tpu.memory_space<vmem>>, vector<1x1xf32>
    %cst_14 = arith.constant dense<0.000000e+00> : vector<1xf32>
    %40 = vector.multi_reduction <add>, %38, %cst_14 [0] : vector<8x1xf32> to vector<1xf32>
    %41 = vector.shape_cast %40 : vector<1xf32> to vector<1x1xf32>
    %42 = arith.addf %39, %41 : vector<1x1xf32>
    %c0_15 = arith.constant 0 : index
    %c0_16 = arith.constant 0 : index
    %43 = vector.load %arg3[%c0_15, %c0_16] : memref<1x1xf32, #tpu.memory_space<vmem>>, vector<1x1xf32>
    tpu.vector_store %arg3[%c0_15, %c0_16], %42 {strides = array<i32>} : memref<1x1xf32, #tpu.memory_space<vmem>>, vector<1x1xf32>,
    %c1_i32 = arith.constant 1 : i32
    %44 = arith.cmpi eq, %arg0, %c1_i32 : i32
    %45 = arith.extui %44 : i1 to i32
    %c0_i32_17 = arith.constant 0 : i32
    %46 = arith.cmpi ne, %45, %c0_i32_17 : i32
    scf.if %46 {
      %c0_18 = arith.constant 0 : index
      %c0_19 = arith.constant 0 : index
      %47 = vector.load %arg3[%c0_18, %c0_19] : memref<1x1xf32, #tpu.memory_space<vmem>>, vector<1x1xf32>
      %cst_20 = arith.constant 6.250000e-02 : f32
      %48 = vector.broadcast %cst_20 : f32 to vector<1x1xf32>
      %49 = arith.mulf %47, %48 : vector<1x1xf32>
      %c0_21 = arith.constant 0 : index
      %c0_22 = arith.constant 0 : index
      %50 = vector.load %arg3[%c0_21, %c0_22] : memref<1x1xf32, #tpu.memory_space<vmem>>, vector<1x1xf32>
      tpu.vector_store %arg3[%c0_21, %c0_22], %49 {strides = array<i32>} : memref<1x1xf32, #tpu.memory_space<vmem>>, vector<1x1xf32>,
    } else {
    }
    return
  }
  func.func @transform_0(%arg0: i32) -> (i32, i32) {
    %c0_i32 = arith.constant 0 : i32
    %c0_i32_0 = arith.constant 0 : i32
    return %arg0, %c0_i32 : i32, i32
  }
  func.func @transform_1(%arg0: i32) -> (i32, i32) {
    %c0_i32 = arith.constant 0 : i32
    %c0_i32_0 = arith.constant 0 : i32
    return %arg0, %c0_i32 : i32, i32
  }
  func.func @transform_2(%arg0: i32) -> (i32, i32) {
    %c0_i32 = arith.constant 0 : i32
    %c0_i32_0 = arith.constant 0 : i32
    %c0_i32_1 = arith.constant 0 : i32
    return %c0_i32, %c0_i32_0 : i32, i32
  }
}

</mosaic_0001>

<llo_original>
// kernel: tpu_custom_call.1
$region0: #{tpu_custom_call.1}
  #allocation0 [shape = 'u32[]', space=smem, size = 0x4, offset = 0x4, fixed_abs, tag = 'smem constant byte address 0x4 - core index']
  #allocation1 [shape = 'u32[72,128]{1,0:T(1,128)}', space=vmem, size = 0x9000, scoped, tag = 'internal scratch']
  %s0 = inlined_call_operand.vmem [shape: f32[16,32], index: 0, kind: input, shape index: {}]
  %s1 = inlined_call_operand.vmem [shape: s32[16,1], index: 1, kind: input, shape index: {}]
  %s2 = inlined_call_operand.hbm [shape: f32[1,1], index: 2, kind: output, shape index: {}]
  %s3 = sld [smem:[#allocation0]]
  $region49: #{tpu_custom_call.1} parent=0
    _
  %s5 = ssub.s32 1, %s3
  %s6 = scalar_select 0, %s5, %s3
  $region1: #{tpu_custom_call.1} parent=0
    #allocation2 [shape = 'u8[512]{0}', space=vmem, size = 0x400, scoped, tag = 'output window, operand 0, single buffered']
    #allocation3 [shape = 's32[2]{0}', space=sflag, size = 0x8, scoped, tag = 'scoped memory for tpu_custom_call.1']
    %7 = vsyncpa [#allocation3], 0
    loop: start=0, step=1, limit=4
    $region2: #{tpu_custom_call.1} parent=1 // loop_pre_header
      _
    $region3: #{tpu_custom_call.1} parent=1 // loop_header
      %s9 = sphi 0, %s13
      %p10 = scmp.ge.s32.totalorder %s9, 4
      %s19 = sphi 0, %s21
      %s22 = sphi 0, %s19
      %s23 = sphi 0, %s22
      %s39 = sphi 0, %s23
      %s45 = sphi 0, %s47
      %s48 = sphi 0, %s45
      %s49 = sphi 0, %s48
      %s65 = sphi 0, %s49
      %s69 = sphi 0, %s69
      %s71 = sphi 0, %s69
      %s72 = sphi 0, %s71
      %s86 = sphi 0, %s72
    $region4: #{tpu_custom_call.1} parent=1 // loop_header_branch
      %12 = sbr.rel (%p10) target = $region8
    $region5: #{tpu_custom_call.1} parent=1 // loop_body
      %s14 = ssub.s32 %s9, 1
      %s15 = ssub.s32 %s9, 2
      %s16 = sadd.s32 %s9, 1
      %s17 = ssub.s32 %s9, %s16
      %p18 = scmp.eq.s32.totalorder %s17, 0
      %s20 = sadd.s32 %s19, 1
      %s21 = scalar_select %p18, %s19, %s20
      %p24 = pneg %p18
      %p25 = scmp.eq.s32.totalorder %s9, 1
      %p26 = por %p24, %p25
      %p27 = scmp.ne.s32.totalorder %s19, %s22
      %p28 = scmp.eq.s32.totalorder %s9, 0
      %p29 = por %p27, %p28
      %p30 = scmp.ne.s32.totalorder %s19, %s22
      %p31 = scmp.eq.s32.totalorder %s14, 1
      %p32 = por %p30, %p31
      %p33 = scmp.ne.s32.totalorder %s22, %s23
      %p34 = scmp.eq.s32.totalorder %s14, 0
      %p35 = por %p33, %p34
      %p36 = scmp.ne.s32.totalorder %s22, %s23
      %p37 = scmp.eq.s32.totalorder %s15, 1
      %p38 = por %p36, %p37
      %p40 = scmp.ne.s32.totalorder %s23, %s39
      %p41 = scmp.eq.s32.totalorder %s15, 0
      %p42 = por %p40, %p41
      %s43 = ssub.s32 %s9, %s16
      %p44 = scmp.eq.s32.totalorder %s43, 0
      %s46 = sadd.s32 %s45, 1
      %s47 = scalar_select %p44, %s45, %s46
      %p50 = pneg %p44
      %p51 = scmp.eq.s32.totalorder %s9, 1
      %p52 = por %p50, %p51
      %p53 = scmp.ne.s32.totalorder %s45, %s48
      %p54 = scmp.eq.s32.totalorder %s9, 0
      %p55 = por %p53, %p54
      %p56 = scmp.ne.s32.totalorder %s45, %s48
      %p57 = scmp.eq.s32.totalorder %s14, 1
      %p58 = por %p56, %p57
      %p59 = scmp.ne.s32.totalorder %s48, %s49
      %p60 = scmp.eq.s32.totalorder %s14, 0
      %p61 = por %p59, %p60
      %p62 = scmp.ne.s32.totalorder %s48, %s49
      %p63 = scmp.eq.s32.totalorder %s15, 1
      %p64 = por %p62, %p63
      %p66 = scmp.ne.s32.totalorder %s49, %s65
      %p67 = scmp.eq.s32.totalorder %s15, 0
      %p68 = por %p66, %p67
      %s70 = sadd.s32 %s69, 1
      %p73 = scmp.eq.s32.totalorder %s9, 1
      %p74 = scmp.ne.s32.totalorder %s69, %s71
      %p75 = scmp.eq.s32.totalorder %s9, 0
      %p76 = por %p74, %p75
      %p77 = scmp.ne.s32.totalorder %s69, %s71
      %p78 = scmp.eq.s32.totalorder %s14, 1
      %p79 = por %p77, %p78
      %p80 = scmp.ne.s32.totalorder %s71, %s72
      %p81 = scmp.eq.s32.totalorder %s14, 0
      %p82 = por %p80, %p81
      %p83 = scmp.ne.s32.totalorder %s71, %s72
      %p84 = scmp.eq.s32.totalorder %s15, 1
      %p85 = por %p83, %p84
      %p87 = scmp.ne.s32.totalorder %s72, %s86
      %p88 = scmp.eq.s32.totalorder %s15, 0
      %p89 = por %p87, %p88
      %p90 = scmp.le.s32.totalorder 1, %s9
      %p91 = scmp.lt.s32.totalorder %s9, 3
      %p92 = pnand %p90, %p91
      %p93 = pneg %p92
      // Predicated region
      $region9: #{tpu_custom_call.1} parent=5 // pred_check
        _
      $region10: #{tpu_custom_call.1} parent=5 // pred_check_branch
        %95 = sbr.rel (%p92) target = $region12
      $region11: #{tpu_custom_call.1} parent=5 // pred_region
        %s96 = ssub.s32 %s9, 1
      $region12: #{tpu_custom_call.1} parent=5 // pred_fallthru
        _
      %p97 = scmp.lt.s32.totalorder %s9, 2
      // Predicated region
      $region13: #{tpu_custom_call.1} parent=5 // pred_check
        %p98 = pneg %p97
      $region14: #{tpu_custom_call.1} parent=5 // pred_check_branch
        %100 = sbr.rel (%p98) target = $region16
      $region15: #{tpu_custom_call.1} parent=5 // pred_region
        // Predicated region
        $region17: #{tpu_custom_call.1} parent=15 // pred_check
          %p101 = pneg %p29
        $region18: #{tpu_custom_call.1} parent=15 // pred_check_branch
          %103 = sbr.rel (%p101) target = $region20
        $region19: #{tpu_custom_call.1} parent=15 // pred_region
          %p104 = scmp.lt.s32.totalorder %s9, 1
          %s105 = scalar_select %p104, %s9, 1
          %s106 = smul.addr %s105, 8
          %s107 = scalar_lea.vmem %s0, %s106
        $region20: #{tpu_custom_call.1} parent=15 // pred_fallthru
          _
        // Predicated region
        $region21: #{tpu_custom_call.1} parent=15 // pred_check
          %p108 = pneg %p55
        $region22: #{tpu_custom_call.1} parent=15 // pred_check_branch
          %110 = sbr.rel (%p108) target = $region24
        $region23: #{tpu_custom_call.1} parent=15 // pred_region
          %p111 = scmp.lt.s32.totalorder %s9, 1
          %s112 = scalar_select %p111, %s9, 1
          %s113 = smul.addr %s112, 8
          %s114 = scalar_lea.vmem %s1, %s113
        $region24: #{tpu_custom_call.1} parent=15 // pred_fallthru
          _
      $region16: #{tpu_custom_call.1} parent=5 // pred_fallthru
        _
      %p115 = scmp.le.s32.totalorder 1, %s9
      %p116 = scmp.lt.s32.totalorder %s9, 3
      %p117 = pnand %p115, %p116
      %p118 = pneg %p117
      // Predicated region
      $region25: #{tpu_custom_call.1} parent=5 // pred_check
        _
      $region26: #{tpu_custom_call.1} parent=5 // pred_check_branch
        %120 = sbr.rel (%p117) target = $region28
      $region27: #{tpu_custom_call.1} parent=5 // pred_region
        %s121 = ssub.s32 %s9, 1
        %p122 = scmp.lt.s32.totalorder %s14, 1
        %s123 = scalar_select %p122, %s14, 1
        %s124 = smul.addr %s123, 8
        %s125 = scalar_lea.vmem %s0, %s124
        %p126 = pneg %p35
        %p127 = pneg %p32
        %p128 = scmp.lt.s32.totalorder %s14, 1
        %s129 = scalar_select %p128, %s14, 1
        %s130 = smul.addr %s129, 8
        %s131 = scalar_lea.vmem %s1, %s130
        %p132 = pneg %p61
        %p133 = pneg %p58
        %p134 = pneg %p82
        %p135 = pneg %p79
        %p136 = scmp.lt.s32.totalorder %s14, 1
        %s137 = scalar_select %p136, %s14, 1
        %s138 = smul.addr %s137, 8
        %s139 = scalar_lea.vmem %s0, %s138
        %p140 = scmp.lt.s32.totalorder %s14, 1
        %s141 = scalar_select %p140, %s14, 1
        %s142 = smul.addr %s141, 8
        %s143 = scalar_lea.vmem %s1, %s142
        %p144 = scmp.eq.s32.totalorder %s14, 0
        // Predicated region
        $region29: #{tpu_custom_call.1} parent=27 // pred_check
          %p145 = pneg %p144
        $region30: #{tpu_custom_call.1} parent=27 // pred_check_branch
          %147 = sbr.rel (%p145) target = $region32
        $region31: #{tpu_custom_call.1} parent=27 // pred_region
          %vm148 = vcmask 0
          %149 = vst.msk [vmem:[#allocation2] sm:$0x1] %vm148, 0.0
        $region32: #{tpu_custom_call.1} parent=27 // pred_fallthru
          _
        %v150 = vld [vmem:[%s139] sm:$0xff]
        %v151 = vld [vmem:[%s143] sm:$0xff]
        %vm152 = vcmask 261120
        %v153 = vsel %vm152, %v150, -inf
        %154 = vmax.xlane.f32.xlu0 %v153
        %v155 = vpop.xlane.xlu0 %154
        %v156 = vsub.f32 %v150, %v155
        %v157 = vmul.f32 %v156, 1.442695
        %v158 = vpow.pop %v157
        %v159 = vsel %vm152, %v158, 0.0
        %160 = vadd.xlane.f32.xlu0 %v159
        %v161 = vpop.xlane.xlu0 %160
        %v162 = vlog2.pop %v161
        %v163 = vmul.f32 %v162, 0.6931472
        %v164 = vlaneseq
        %v165 = vand.u32 %v164, 127
        %166 = vset.pattern.permute.xlu0 0
        %167 = vperm.xlu0 %166, %v151
        %v168 = vpop.permute.xlu0 %167
        %vm169 = vcmp.eq.s32.totalorder %v165, %v168
        %v170 = vsel %vm169, %v156, 0.0
        %v171 = vsel %vm152, %v170, 0.0
        %172 = vadd.xlane.f32.xlu0 %v171
        %v173 = vpop.xlane.xlu0 %172
        %v174 = vsel %vm152, %v156, 0.0
        %175 = vadd.xlane.f32.xlu0 %v174
        %v176 = vpop.xlane.xlu0 %175
        %v177 = vsub.f32 %v163, %v173
        %v178 = vmul.f32 %v176, 0.03125
        %v179 = vsub.f32 %v163, %v178
        %v180 = vmul.f32 %v177, 0.9
        %v181 = vmul.f32 %v179, 0.1
        %v182 = vadd.f32 %v180, %v181
        %s183 = smul.u32 %s14, 8
        %v184 = vlaneseq
        %v185 = vshrl.u32 %v184, 7
        %v186 = vstv %s183
        %v187 = vadd.s32 %v186, %v185
        %vm188 = vcmp.lt.s32.totalorder %v187, 16
        %v189 = vsel %vm188, %v182, 0.0
        %v190 = vld [vmem:[#allocation2] sm:$0x1]
        %v191 = vrot.slane %v189, 4
        %v192 = vadd.f32 %v189, %v191
        %v193 = vrot.slane %v192, 2
        %v194 = vadd.f32 %v192, %v193
        %v195 = vrot.slane %v194, 1
        %v196 = vadd.f32 %v194, %v195
        %v197 = vadd.f32 %v190, %v196
        %vm198 = vcmask 0
        %199 = vst.msk [vmem:[#allocation2] sm:$0x1] %vm198, %v197
        %p200 = scmp.eq.s32.totalorder %s14, 1
        // Predicated region
        $region33: #{tpu_custom_call.1} parent=27 // pred_check
          %p201 = pneg %p200
        $region34: #{tpu_custom_call.1} parent=27 // pred_check_branch
          %203 = sbr.rel (%p201) target = $region36
        $region35: #{tpu_custom_call.1} parent=27 // pred_region
          %v204 = vld [vmem:[#allocation2] sm:$0x1]
          %v205 = vmul.f32 %v204, 0.0625
          %206 = vst.msk [vmem:[#allocation2] sm:$0x1] %vm198, %v205
        $region36: #{tpu_custom_call.1} parent=27 // pred_fallthru
          _
        // Predicated region
        $region37: #{tpu_custom_call.1} parent=27 // pred_check
          %p207 = pneg %p79
        $region38: #{tpu_custom_call.1} parent=27 // pred_check_branch
          %209 = sbr.rel (%p207) target = $region40
        $region39: #{tpu_custom_call.1} parent=27 // pred_region
          %211 = vsyncadd [#allocation3], 0
          %s213 = sshll.u32 [#allocation2], 4
          %s214 = int_to_ptr.vmem [resolvable:$true] %s213
          %s215 = sshll.u32 %s2, 4
          %s216 = int_to_ptr.hbm [resolvable:$true] %s215
          %218 = dma.vmem_to_hbm [thread:$0]  %s214, 16, %s216, [#allocation3]
        $region40: #{tpu_custom_call.1} parent=27 // pred_fallthru
          _
        // Predicated region
        $region41: #{tpu_custom_call.1} parent=27 // pred_check
          %p219 = pneg %p79
        $region42: #{tpu_custom_call.1} parent=27 // pred_check_branch
          %221 = sbr.rel (%p219) target = $region44
        $region43: #{tpu_custom_call.1} parent=27 // pred_region
          %223 = dma.done [#allocation3], 16
        $region44: #{tpu_custom_call.1} parent=27 // pred_fallthru
          _
      $region28: #{tpu_custom_call.1} parent=5 // pred_fallthru
        _
      %p224 = scmp.le.s32.totalorder 2, %s9
      // Predicated region
      $region45: #{tpu_custom_call.1} parent=5 // pred_check
        %p225 = pneg %p224
      $region46: #{tpu_custom_call.1} parent=5 // pred_check_branch
        %227 = sbr.rel (%p225) target = $region48
      $region47: #{tpu_custom_call.1} parent=5 // pred_region
        %s228 = ssub.s32 %s9, 2
      $region48: #{tpu_custom_call.1} parent=5 // pred_fallthru
        _
    $region6: #{tpu_custom_call.1} parent=1 // loop_footer
      %s13 = sadd.s32 1, %s9
    $region7: #{tpu_custom_call.1} parent=1 // loop_footer_branch
      %8 = sbr.rel target = $region3
    $region8: #{tpu_custom_call.1} parent=1 // loop_exit
      _
    %229 = vsyncpa [#allocation3], 1
    %s230 = scalar_lea.sflag [#allocation3], 1
    %231 = vsyncpa %s230, 1

</llo_original>
